<compile_context>
chip_gen: v5e
topology: v5e:2x2
jax: 0.10.0
libtpu: 0.0.40
codegen_flags: <defaults>
</compile_context>

<pallas_src>
import functools

import jax
import jax.numpy as jnp
from jax.experimental import pallas as pl
from jax.experimental.pallas import tpu as pltpu

_LANE = 128     # lane width: last-dim padding target
_SUBLANE = 8    # sublane: second-to-last dim padding target


def _leaky_relu(x, slope=0.1):
    return jnp.where(x > 0, x, slope * x)


def _round_up(n, m):
    return ((n + m - 1) // m) * m


def _pad2(x, rows, cols):
    return jnp.pad(x, ((0, rows - x.shape[0]), (0, cols - x.shape[1])))


def graph_pooling_kernel(a_ref, x_ref,
                         w1_ref, b1_ref,
                         w2_ref, b2_ref,
                         w3_ref, b3_ref,
                         st_ref, o_ref, *, valid_m):
    A = a_ref[...]  # bf16 (Np, Np)

    # Layer 1, reassociated: (A @ X) @ W1 + b1 — narrow in_feats on the N^2 matmul.
    ax = jnp.dot(A, x_ref[...].astype(jnp.bfloat16),
                 preferred_element_type=jnp.float32)
    h = jnp.dot(ax, w1_ref[...], preferred_element_type=jnp.float32) + b1_ref[...]
    h = _leaky_relu(h)

    # Layer 2: A @ (h @ W2) + b2
    hw = jnp.dot(h, w2_ref[...], preferred_element_type=jnp.float32)
    h = jnp.dot(A, hw.astype(jnp.bfloat16),
                preferred_element_type=jnp.float32) + b2_ref[...]
    h = _leaky_relu(h)

    # Layer 3 (no activation): A @ (h @ W3) + b3
    hw = jnp.dot(h, w3_ref[...], preferred_element_type=jnp.float32)
    h = jnp.dot(A, hw.astype(jnp.bfloat16),
                preferred_element_type=jnp.float32) + b3_ref[...]

    # Pooling: h @ S^T (S already pre-transposed in the wrapper), masked row softmax.
    logits = jnp.dot(h, st_ref[...], preferred_element_type=jnp.float32)
    col = jax.lax.broadcasted_iota(jnp.int32, logits.shape, 1)
    logits = jnp.where(col < valid_m, logits, jnp.full_like(logits, -1e30))
    m = jnp.max(logits, axis=1, keepdims=True)
    e = jnp.exp(logits - m)
    denom = jnp.sum(e, axis=1, keepdims=True)
    o_ref[...] = (e * pl.reciprocal(denom, approx=True)).astype(o_ref.dtype)


def graph_pooling(a_norm, x, w1, b1, w2, b2, w3, b3, s):
    N, F = x.shape
    H1 = w1.shape[1]
    H2 = w2.shape[1]
    D = w3.shape[1]
    M = s.shape[0]

    # Pad to lane-dense / sublane-aligned shapes (zero fill is numerically free;
    # only the softmax needs the explicit column mask done in-kernel).
    Np = _round_up(N, _SUBLANE)
    Fp = _round_up(F, _LANE)
    H1p = _round_up(H1, _LANE)
    H2p = _round_up(H2, _LANE)
    Dp = _round_up(D, _LANE)
    Mp = _round_up(M, _LANE)

    a_p = _pad2(a_norm, Np, Np).astype(jnp.bfloat16)   # bf16 halves VMEM + 2x MXU rate
    x_p = _pad2(x, Np, Fp)
    w1_p = _pad2(w1, Fp, H1p)
    b1_p = _pad2(b1, 1, H1p)
    w2_p = _pad2(w2, H1p, H2p)
    b2_p = _pad2(b2, 1, H2p)
    w3_p = _pad2(w3, H2p, Dp)
    b3_p = _pad2(b3, 1, Dp)
    st_p = _pad2(s.T, Dp, Mp)                          # pre-transposed pooling matrix

    # Advisory cost estimate (padded-shape arithmetic) for XLA scheduling.
    flops = 2 * (
        Np * Np * Fp + Np * Fp * H1p      # layer 1
        + Np * H1p * H2p + Np * Np * H2p  # layer 2
        + Np * H2p * Dp + Np * Np * Dp    # layer 3
        + Np * Dp * Mp                    # pooling matmul
    )
    transcendentals = Np * Mp + Np        # exp + approx reciprocal
    operands = (a_p, x_p, w1_p, b1_p, w2_p, b2_p, w3_p, b3_p, st_p)
    bytes_accessed = sum(int(t.size) * t.dtype.itemsize for t in operands)
    bytes_accessed += Np * Mp * 4         # output

    vmem = pl.BlockSpec(memory_space=pltpu.MemorySpace.VMEM)
    out_padded = pl.pallas_call(
        functools.partial(graph_pooling_kernel, valid_m=M),
        out_shape=jax.ShapeDtypeStruct((Np, Mp), jnp.float32),
        in_specs=[vmem] * 9,
        out_specs=vmem,
        cost_estimate=pl.CostEstimate(
            flops=flops,
            transcendentals=transcendentals,
            bytes_accessed=bytes_accessed,
        ),
    )(*operands)
    return out_padded[:N, :M]


def normalize_adjacency(adj):
    """D^{-1/2} (A + I) D^{-1/2} — plain-JAX glue (graph preprocessing)."""
    n = adj.shape[0]
    a = adj + jnp.eye(n, dtype=adj.dtype)
    deg = jnp.sum(a, axis=1)
    d_inv_sqrt = 1.0 / jnp.sqrt(jnp.maximum(deg, 1e-12))
    return a * d_inv_sqrt[:, None] * d_inv_sqrt[None, :]


def graph_pooling_ref(a_norm, x, w1, b1, w2, b2, w3, b3, s):
    h = _leaky_relu(a_norm @ (x @ w1) + b1)
    h = _leaky_relu(a_norm @ (h @ w2) + b2)
    h = a_norm @ (h @ w3) + b3
    logits = h @ s.T
    return jax.nn.softmax(logits, axis=1)


if __name__ == "__main__":
    key = jax.random.PRNGKey(0)
    N, in_feats, hidden1, hidden2, out_dim, M = 8, 16, 32, 32, 16, 4

    k = jax.random.split(key, 9)
    # random undirected graph
    rand_adj = (jax.random.uniform(k[0], (N, N)) > 0.6).astype(jnp.float32)
    adj = jnp.maximum(rand_adj, rand_adj.T)
    a_norm = normalize_adjacency(adj)

    x = jax.random.normal(k[1], (N, in_feats), dtype=jnp.float32)
    s = jax.random.normal(k[2], (M, out_dim), dtype=jnp.float32)

    # GraphConv weight shapes: (d_in, d_out), bias (1, d_out)
    w1 = jax.random.normal(k[3], (in_feats, hidden1), dtype=jnp.float32) * 0.1
    b1 = jax.random.normal(k[4], (1, hidden1), dtype=jnp.float32) * 0.1
    w2 = jax.random.normal(k[5], (hidden1, hidden2), dtype=jnp.float32) * 0.1
    b2 = jax.random.normal(k[6], (1, hidden2), dtype=jnp.float32) * 0.1
    w3 = jax.random.normal(k[7], (hidden2, out_dim), dtype=jnp.float32) * 0.1
    b3 = jax.random.normal(k[8], (1, out_dim), dtype=jnp.float32) * 0.1

    out = graph_pooling(a_norm, x, w1, b1, w2, b2, w3, b3, s)
    out = jax.block_until_ready(out)

    ref = graph_pooling_ref(a_norm, x, w1, b1, w2, b2, w3, b3, s)
    assert out.shape == (N, M)
    # bf16 adjacency matmuls + approx reciprocal -> looser (but meaningful) tolerances.
    assert jnp.allclose(out, ref, atol=1e-2, rtol=1e-2), "mismatch vs reference"
    assert jnp.allclose(jnp.sum(out, axis=1), 1.0, atol=1e-2), "softmax rows must sum to 1"

    print("KERNEL_OK")
</pallas_src>

<mosaic_0001>
module attributes {stable_mosaic.version = 11 : i64} {
  func.func @graph_pooling_kernel(%arg0: memref<8x8xbf16, #tpu.memory_space<vmem>>, %arg1: memref<8x128xf32, #tpu.memory_space<vmem>>, %arg2: memref<128x128xf32, #tpu.memory_space<vmem>>, %arg3: memref<1x128xf32, #tpu.memory_space<vmem>>, %arg4: memref<128x128xf32, #tpu.memory_space<vmem>>, %arg5: memref<1x128xf32, #tpu.memory_space<vmem>>, %arg6: memref<128x128xf32, #tpu.memory_space<vmem>>, %arg7: memref<1x128xf32, #tpu.memory_space<vmem>>, %arg8: memref<128x128xf32, #tpu.memory_space<vmem>>, %arg9: memref<8x128xf32, #tpu.memory_space<vmem>>) attributes {dimension_semantics = [], scalar_prefetch = 0 : i64, scratch_operands = 0 : i64, tpu.core_type = #tpu.core_type<tc>} {
    %c0 = arith.constant 0 : index
    %c0_0 = arith.constant 0 : index
    %0 = vector.load %arg0[%c0, %c0_0] : memref<8x8xbf16, #tpu.memory_space<vmem>>, vector<8x8xbf16>
    %c0_1 = arith.constant 0 : index
    %c0_2 = arith.constant 0 : index
    %1 = vector.load %arg1[%c0_1, %c0_2] : memref<8x128xf32, #tpu.memory_space<vmem>>, vector<8x128xf32>
    %2 = arith.truncf %1 : vector<8x128xf32> to vector<8x128xbf16>
    %cst = arith.constant dense<0.000000e+00> : vector<8x128xf32>
    %3 = tpu.matmul %0, %2, %cst {dimension_numbers = #tpu.dot_dimension_numbers<[1], [0], [0], [1], [0, 0, 1, 1], [], []>} : vector<8x8xbf16>, vector<8x128xbf16>, vector<8x128xf32> -> vector<8x128xf32>
    %c0_3 = arith.constant 0 : index
    %c0_4 = arith.constant 0 : index
    %4 = vector.load %arg2[%c0_3, %c0_4] : memref<128x128xf32, #tpu.memory_space<vmem>>, vector<128x128xf32>
    %cst_5 = arith.constant dense<0.000000e+00> : vector<8x128xf32>
    %5 = tpu.matmul %3, %4, %cst_5 {dimension_numbers = #tpu.dot_dimension_numbers<[1], [0], [0], [1], [0, 0, 1, 1], [], []>} : vector<8x128xf32>, vector<128x128xf32>, vector<8x128xf32> -> vector<8x128xf32>
    %c0_6 = arith.constant 0 : index
    %c0_7 = arith.constant 0 : index
    %6 = vector.load %arg3[%c0_6, %c0_7] : memref<1x128xf32, #tpu.memory_space<vmem>>, vector<1x128xf32>
    %7 = vector.broadcast %6 : vector<1x128xf32> to vector<8x128xf32>
    %8 = arith.addf %5, %7 : vector<8x128xf32>
    %cst_8 = arith.constant 0.000000e+00 : f32
    %9 = vector.broadcast %cst_8 : f32 to vector<8x128xf32>
    %10 = arith.cmpf ogt, %8, %9 : vector<8x128xf32>
    %cst_9 = arith.constant 1.000000e-01 : f32
    %11 = vector.broadcast %cst_9 : f32 to vector<8x128xf32>
    %12 = arith.mulf %11, %8 : vector<8x128xf32>
    %13 = arith.select %10, %8, %12 : vector<8x128xi1>, vector<8x128xf32>
    %c0_10 = arith.constant 0 : index
    %c0_11 = arith.constant 0 : index
    %14 = vector.load %arg4[%c0_10, %c0_11] : memref<128x128xf32, #tpu.memory_space<vmem>>, vector<128x128xf32>
    %cst_12 = arith.constant dense<0.000000e+00> : vector<8x128xf32>
    %15 = tpu.matmul %13, %14, %cst_12 {dimension_numbers = #tpu.dot_dimension_numbers<[1], [0], [0], [1], [0, 0, 1, 1], [], []>} : vector<8x128xf32>, vector<128x128xf32>, vector<8x128xf32> -> vector<8x128xf32>
    %16 = arith.truncf %15 : vector<8x128xf32> to vector<8x128xbf16>
    %cst_13 = arith.constant dense<0.000000e+00> : vector<8x128xf32>
    %17 = tpu.matmul %0, %16, %cst_13 {dimension_numbers = #tpu.dot_dimension_numbers<[1], [0], [0], [1], [0, 0, 1, 1], [], []>} : vector<8x8xbf16>, vector<8x128xbf16>, vector<8x128xf32> -> vector<8x128xf32>
    %c0_14 = arith.constant 0 : index
    %c0_15 = arith.constant 0 : index
    %18 = vector.load %arg5[%c0_14, %c0_15] : memref<1x128xf32, #tpu.memory_space<vmem>>, vector<1x128xf32>
    %19 = vector.broadcast %18 : vector<1x128xf32> to vector<8x128xf32>
    %20 = arith.addf %17, %19 : vector<8x128xf32>
    %cst_16 = arith.constant 0.000000e+00 : f32
    %21 = vector.broadcast %cst_16 : f32 to vector<8x128xf32>
    %22 = arith.cmpf ogt, %20, %21 : vector<8x128xf32>
    %cst_17 = arith.constant 1.000000e-01 : f32
    %23 = vector.broadcast %cst_17 : f32 to vector<8x128xf32>
    %24 = arith.mulf %23, %20 : vector<8x128xf32>
    %25 = arith.select %22, %20, %24 : vector<8x128xi1>, vector<8x128xf32>
    %c0_18 = arith.constant 0 : index
    %c0_19 = arith.constant 0 : index
    %26 = vector.load %arg6[%c0_18, %c0_19] : memref<128x128xf32, #tpu.memory_space<vmem>>, vector<128x128xf32>
    %cst_20 = arith.constant dense<0.000000e+00> : vector<8x128xf32>
    %27 = tpu.matmul %25, %26, %cst_20 {dimension_numbers = #tpu.dot_dimension_numbers<[1], [0], [0], [1], [0, 0, 1, 1], [], []>} : vector<8x128xf32>, vector<128x128xf32>, vector<8x128xf32> -> vector<8x128xf32>
    %28 = arith.truncf %27 : vector<8x128xf32> to vector<8x128xbf16>
    %cst_21 = arith.constant dense<0.000000e+00> : vector<8x128xf32>
    %29 = tpu.matmul %0, %28, %cst_21 {dimension_numbers = #tpu.dot_dimension_numbers<[1], [0], [0], [1], [0, 0, 1, 1], [], []>} : vector<8x8xbf16>, vector<8x128xbf16>, vector<8x128xf32> -> vector<8x128xf32>
    %c0_22 = arith.constant 0 : index
    %c0_23 = arith.constant 0 : index
    %30 = vector.load %arg7[%c0_22, %c0_23] : memref<1x128xf32, #tpu.memory_space<vmem>>, vector<1x128xf32>
    %31 = vector.broadcast %30 : vector<1x128xf32> to vector<8x128xf32>
    %32 = arith.addf %29, %31 : vector<8x128xf32>
    %c0_24 = arith.constant 0 : index
    %c0_25 = arith.constant 0 : index
    %33 = vector.load %arg8[%c0_24, %c0_25] : memref<128x128xf32, #tpu.memory_space<vmem>>, vector<128x128xf32>
    %cst_26 = arith.constant dense<0.000000e+00> : vector<8x128xf32>
    %34 = tpu.matmul %32, %33, %cst_26 {dimension_numbers = #tpu.dot_dimension_numbers<[1], [0], [0], [1], [0, 0, 1, 1], [], []>} : vector<8x128xf32>, vector<128x128xf32>, vector<8x128xf32> -> vector<8x128xf32>
    %35 = tpu.iota {dimensions = array<i32: 1>} : vector<8x128xi32>
    %c4_i32 = arith.constant 4 : i32
    %36 = vector.broadcast %c4_i32 : i32 to vector<8x128xi32>
    %37 = arith.cmpi slt, %35, %36 : vector<8x128xi32>
    %cst_27 = arith.constant -1.000000e+30 : f32
    %38 = vector.broadcast %cst_27 : f32 to vector<8x128xf32>
    %39 = arith.select %37, %34, %38 : vector<8x128xi1>, vector<8x128xf32>
    %cst_28 = arith.constant dense<0xFF800000> : vector<8xf32>
    %40 = vector.multi_reduction <maximumf>, %39, %cst_28 [1] : vector<8x128xf32> to vector<8xf32>
    %41 = vector.shape_cast %40 : vector<8xf32> to vector<8x1xf32>
    %42 = vector.broadcast %41 : vector<8x1xf32> to vector<8x128xf32>
    %43 = arith.subf %39, %42 : vector<8x128xf32>
    %44 = math.exp %43 : vector<8x128xf32>
    %cst_29 = arith.constant dense<0.000000e+00> : vector<8xf32>
    %45 = vector.multi_reduction <add>, %44, %cst_29 [1] : vector<8x128xf32> to vector<8xf32>
    %46 = vector.shape_cast %45 : vector<8xf32> to vector<8x1xf32>
    %47 = tpu.reciprocal %46 {approx = true} : vector<8x1xf32> -> vector<8x1xf32>
    %48 = vector.broadcast %47 : vector<8x1xf32> to vector<8x128xf32>
    %49 = arith.mulf %44, %48 : vector<8x128xf32>
    %c0_30 = arith.constant 0 : index
    %c0_31 = arith.constant 0 : index
    %50 = vector.load %arg9[%c0_30, %c0_31] : memref<8x128xf32, #tpu.memory_space<vmem>>, vector<8x128xf32>
    tpu.vector_store %arg9[%c0_30, %c0_31], %49 {strides = array<i32>} : memref<8x128xf32, #tpu.memory_space<vmem>>, vector<8x128xf32>,
    return
  }
}

</mosaic_0001>

<llo_original>
// kernel: tpu_custom_call.1
$region0: #{tpu_custom_call.1}
  #allocation0 [shape = 'u32[]', space=smem, size = 0x4, offset = 0x4, fixed_abs, tag = 'smem constant byte address 0x4 - core index']
  #allocation1 [shape = 'u32[72,128]{1,0:T(1,128)}', space=vmem, size = 0x9000, scoped, tag = 'internal scratch']
  %s0 = inlined_call_operand.hbm [shape: bf16[8,8], index: 0, kind: input, shape index: {}]
  %s1 = inlined_call_operand.hbm [shape: f32[8,128], index: 1, kind: input, shape index: {}]
  %s2 = inlined_call_operand.hbm [shape: f32[128,128], index: 2, kind: input, shape index: {}]
  %s3 = inlined_call_operand.vmem [shape: f32[1,128], index: 3, kind: input, shape index: {}]
  %s4 = inlined_call_operand.hbm [shape: f32[128,128], index: 4, kind: input, shape index: {}]
  %s5 = inlined_call_operand.vmem [shape: f32[1,128], index: 5, kind: input, shape index: {}]
  %s6 = inlined_call_operand.hbm [shape: f32[128,128], index: 6, kind: input, shape index: {}]
  %s7 = inlined_call_operand.vmem [shape: f32[1,128], index: 7, kind: input, shape index: {}]
  %s8 = inlined_call_operand.hbm [shape: f32[128,128], index: 8, kind: input, shape index: {}]
  %s9 = inlined_call_operand.hbm [shape: f32[8,128], index: 9, kind: output, shape index: {}]
  %s10 = sld [smem:[#allocation0]]
  $region70: #{tpu_custom_call.1} parent=0
    _
  %s12 = ssub.s32 1, %s10
  %s13 = scalar_select 0, %s12, %s10
  $region1: #{tpu_custom_call.1} parent=0
    #allocation2 [shape = 'u8[2048]{0}', space=vmem, size = 0x800, scoped, tag = 'input window, operand 0, single buffered']
    #allocation3 [shape = 's32[1]{0}', space=sflag, size = 0x4, scoped, tag = 'scoped memory for tpu_custom_call.1']
    #allocation4 [shape = 's32[1]{0}', space=sflag, size = 0x4, scoped, tag = 'scoped memory for tpu_custom_call.1']
    #allocation5 [shape = 'u8[4096]{0}', space=vmem, size = 0x1000, scoped, tag = 'input window, operand 1, single buffered']
    #allocation6 [shape = 's32[1]{0}', space=sflag, size = 0x4, scoped, tag = 'scoped memory for tpu_custom_call.1']
    #allocation7 [shape = 'u8[65536]{0}', space=vmem, size = 0x10000, scoped, tag = 'input window, operand 2, single buffered']
    #allocation8 [shape = 'u8[65536]{0}', space=vmem, size = 0x10000, scoped, tag = 'input window, operand 4, single buffered']
    #allocation9 [shape = 's32[1]{0}', space=sflag, size = 0x4, scoped, tag = 'scoped memory for tpu_custom_call.1']
    #allocation10 [shape = 'u8[65536]{0}', space=vmem, size = 0x10000, scoped, tag = 'input window, operand 6, single buffered']
    #allocation11 [shape = 'u8[65536]{0}', space=vmem, size = 0x10000, scoped, tag = 'input window, operand 8, single buffered']
    #allocation12 [shape = 's32[1]{0}', space=sflag, size = 0x4, scoped, tag = 'scoped memory for tpu_custom_call.1']
    #allocation13 [shape = 'u8[4096]{0}', space=vmem, size = 0x1000, scoped, tag = 'output window, operand 0, single buffered']
    %14 = vsyncpa [#allocation3], 0
    %15 = vsyncpa [#allocation6], 0
    %16 = vsyncpa [#allocation9], 0
    %17 = vsyncpa [#allocation12], 0
    %18 = vsyncpa [#allocation4], 0
    // Predicated region
    $region2: #{tpu_custom_call.1} parent=1 // pred_check
      _
    $region3: #{tpu_custom_call.1} parent=1 // pred_check_branch
      %20 = sbr.rel (0) target = $region5
    $region4: #{tpu_custom_call.1} parent=1 // pred_region
      %22 = vsyncadd [#allocation3], 0
      %s24 = sshll.u32 %s0, 4
      %s25 = int_to_ptr.hbm [resolvable:$true] %s24
      %s26 = sshll.u32 [#allocation2], 4
      %s27 = int_to_ptr.vmem [resolvable:$true] %s26
      %29 = dma.hbm_to_vmem [thread:$0]  %s25, 64, %s27, [#allocation3]
    $region5: #{tpu_custom_call.1} parent=1 // pred_fallthru
      _
    // Predicated region
    $region6: #{tpu_custom_call.1} parent=1 // pred_check
      _
    $region7: #{tpu_custom_call.1} parent=1 // pred_check_branch
      %31 = sbr.rel (0) target = $region9
    $region8: #{tpu_custom_call.1} parent=1 // pred_region
      %33 = vsyncadd [#allocation6], 0
      %s35 = sshll.u32 %s1, 4
      %s36 = int_to_ptr.hbm [resolvable:$true] %s35
      %s37 = sshll.u32 [#allocation5], 4
      %s38 = int_to_ptr.vmem [resolvable:$true] %s37
      %40 = dma.hbm_to_vmem [thread:$0]  %s36, 128, %s38, [#allocation6]
    $region9: #{tpu_custom_call.1} parent=1 // pred_fallthru
      _
    // Predicated region
    $region10: #{tpu_custom_call.1} parent=1 // pred_check
      _
    $region11: #{tpu_custom_call.1} parent=1 // pred_check_branch
      %42 = sbr.rel (0) target = $region13
    $region12: #{tpu_custom_call.1} parent=1 // pred_region
      %44 = vsyncadd [#allocation6], 0
      %s45 = sshll.u32 %s2, 4
      %s46 = int_to_ptr.hbm [resolvable:$true] %s45
      %s47 = sshll.u32 [#allocation7], 4
      %s48 = int_to_ptr.vmem [resolvable:$true] %s47
      %53 = dma.hbm_to_vmem [thread:$0]  %s46, 2048, %s48, [#allocation6], 128, 128, 8
    $region13: #{tpu_custom_call.1} parent=1 // pred_fallthru
      _
    // Predicated region
    $region14: #{tpu_custom_call.1} parent=1 // pred_check
      _
    $region15: #{tpu_custom_call.1} parent=1 // pred_check_branch
      %55 = sbr.rel (0) target = $region17
    $region16: #{tpu_custom_call.1} parent=1 // pred_region
      _
    $region17: #{tpu_custom_call.1} parent=1 // pred_fallthru
      _
    // Predicated region
    $region18: #{tpu_custom_call.1} parent=1 // pred_check
      _
    $region19: #{tpu_custom_call.1} parent=1 // pred_check_branch
      %57 = sbr.rel (0) target = $region21
    $region20: #{tpu_custom_call.1} parent=1 // pred_region
      %59 = vsyncadd [#allocation9], 0
      %s60 = sshll.u32 %s4, 4
      %s61 = int_to_ptr.hbm [resolvable:$true] %s60
      %s62 = sshll.u32 [#allocation8], 4
      %s63 = int_to_ptr.vmem [resolvable:$true] %s62
      %68 = dma.hbm_to_vmem [thread:$0]  %s61, 2048, %s63, [#allocation9], 128, 128, 8
    $region21: #{tpu_custom_call.1} parent=1 // pred_fallthru
      _
    // Predicated region
    $region22: #{tpu_custom_call.1} parent=1 // pred_check
      _
    $region23: #{tpu_custom_call.1} parent=1 // pred_check_branch
      %70 = sbr.rel (0) target = $region25
    $region24: #{tpu_custom_call.1} parent=1 // pred_region
      _
    $region25: #{tpu_custom_call.1} parent=1 // pred_fallthru
      _
    // Predicated region
    $region26: #{tpu_custom_call.1} parent=1 // pred_check
      _
    $region27: #{tpu_custom_call.1} parent=1 // pred_check_branch
      %72 = sbr.rel (0) target = $region29
    $region28: #{tpu_custom_call.1} parent=1 // pred_region
      %74 = vsyncadd [#allocation9], 0
      %s75 = sshll.u32 %s6, 4
      %s76 = int_to_ptr.hbm [resolvable:$true] %s75
      %s77 = sshll.u32 [#allocation10], 4
      %s78 = int_to_ptr.vmem [resolvable:$true] %s77
      %83 = dma.hbm_to_vmem [thread:$0]  %s76, 2048, %s78, [#allocation9], 128, 128, 8
    $region29: #{tpu_custom_call.1} parent=1 // pred_fallthru
      _
    // Predicated region
    $region30: #{tpu_custom_call.1} parent=1 // pred_check
      _
    $region31: #{tpu_custom_call.1} parent=1 // pred_check_branch
      %85 = sbr.rel (0) target = $region33
    $region32: #{tpu_custom_call.1} parent=1 // pred_region
      _
    $region33: #{tpu_custom_call.1} parent=1 // pred_fallthru
      _
    // Predicated region
    $region34: #{tpu_custom_call.1} parent=1 // pred_check
      _
    $region35: #{tpu_custom_call.1} parent=1 // pred_check_branch
      %87 = sbr.rel (0) target = $region37
    $region36: #{tpu_custom_call.1} parent=1 // pred_region
      %89 = vsyncadd [#allocation12], 0
      %s90 = sshll.u32 %s8, 4
      %s91 = int_to_ptr.hbm [resolvable:$true] %s90
      %s92 = sshll.u32 [#allocation11], 4
      %s93 = int_to_ptr.vmem [resolvable:$true] %s92
      %98 = dma.hbm_to_vmem [thread:$0]  %s91, 2048, %s93, [#allocation12], 128, 128, 8
    $region37: #{tpu_custom_call.1} parent=1 // pred_fallthru
      _
    // Predicated region
    $region38: #{tpu_custom_call.1} parent=1 // pred_check
      _
    $region39: #{tpu_custom_call.1} parent=1 // pred_check_branch
      %100 = sbr.rel (0) target = $region41
    $region40: #{tpu_custom_call.1} parent=1 // pred_region
      %102 = dma.done [#allocation3], 64
    $region41: #{tpu_custom_call.1} parent=1 // pred_fallthru
      _
    // Predicated region
    $region42: #{tpu_custom_call.1} parent=1 // pred_check
      _
    $region43: #{tpu_custom_call.1} parent=1 // pred_check_branch
      %104 = sbr.rel (0) target = $region45
    $region44: #{tpu_custom_call.1} parent=1 // pred_region
      %106 = dma.done [#allocation6], 128
    $region45: #{tpu_custom_call.1} parent=1 // pred_fallthru
      _
    // Predicated region
    $region46: #{tpu_custom_call.1} parent=1 // pred_check
      _
    $region47: #{tpu_custom_call.1} parent=1 // pred_check_branch
      %108 = sbr.rel (0) target = $region49
    $region48: #{tpu_custom_call.1} parent=1 // pred_region
      %110 = dma.done [#allocation6], 2048
    $region49: #{tpu_custom_call.1} parent=1 // pred_fallthru
      _
    // Predicated region
    $region50: #{tpu_custom_call.1} parent=1 // pred_check
      _
    $region51: #{tpu_custom_call.1} parent=1 // pred_check_branch
      %112 = sbr.rel (0) target = $region53
    $region52: #{tpu_custom_call.1} parent=1 // pred_region
      %114 = dma.done [#allocation9], 2048
    $region53: #{tpu_custom_call.1} parent=1 // pred_fallthru
      _
    // Predicated region
    $region54: #{tpu_custom_call.1} parent=1 // pred_check
      _
    $region55: #{tpu_custom_call.1} parent=1 // pred_check_branch
      %116 = sbr.rel (0) target = $region57
    $region56: #{tpu_custom_call.1} parent=1 // pred_region
      %118 = dma.done [#allocation9], 2048
    $region57: #{tpu_custom_call.1} parent=1 // pred_fallthru
      _
    // Predicated region
    $region58: #{tpu_custom_call.1} parent=1 // pred_check
      _
    $region59: #{tpu_custom_call.1} parent=1 // pred_check_branch
      %120 = sbr.rel (0) target = $region61
    $region60: #{tpu_custom_call.1} parent=1 // pred_region
      %122 = dma.done [#allocation12], 2048
    $region61: #{tpu_custom_call.1} parent=1 // pred_fallthru
      _
    %v124 = vld [vmem:[#allocation2] sm:$0xf]
    %v125 = vld [vmem:[#allocation5] sm:$0xff]
    %v126 = vpack.c.bf16 %v125, %v125
    %vm127 = vcmask 64512
    %v129 = vsel %vm127, %v124, 0
    %vm131 = vcmask 1043456
    %v133 = vsel %vm131, %v126, 0
    %135 = vmatpush.bf16.msra.mxu0 0
    %136 = vmatpush.bf16.msra.mxu0 0
    %137 = vmatpush.bf16.msra.mxu0 0
    %138 = vmatpush.bf16.msra.mxu0 0
    %139 = vmatpush.bf16.msra.mxu0 0
    %140 = vmatpush.bf16.msra.mxu0 0
    %141 = vmatpush.bf16.msra.mxu0 0
    %142 = vmatpush.bf16.msra.mxu0 %v133
    %143 = vmatmul.bf16.gmra.mxu0 %v129
    %v144 = vpop.f32.mrf.mxu0
    %v145 = vadd.f32 0.0, %v144
    %v146 = vpop.f32.mrf.mxu0
    %147 = vdwg.mxu0
    %v148 = vld [vmem:[#allocation7] sm:$0xff]
    %v149 = vld [vmem:[#allocation7 + $0x8] sm:$0xff]
    %v150 = vld [vmem:[#allocation7 + $0x10] sm:$0xff]
    %v151 = vld [vmem:[#allocation7 + $0x18] sm:$0xff]
    %v152 = vld [vmem:[#allocation7 + $0x20] sm:$0xff]
    %v153 = vld [vmem:[#allocation7 + $0x28] sm:$0xff]
    %v154 = vld [vmem:[#allocation7 + $0x30] sm:$0xff]
    %v155 = vld [vmem:[#allocation7 + $0x38] sm:$0xff]
    %v156 = vld [vmem:[#allocation7 + $0x40] sm:$0xff]
    %v157 = vld [vmem:[#allocation7 + $0x48] sm:$0xff]
    %v158 = vld [vmem:[#allocation7 + $0x50] sm:$0xff]
    %v159 = vld [vmem:[#allocation7 + $0x58] sm:$0xff]
    %v160 = vld [vmem:[#allocation7 + $0x60] sm:$0xff]
    %v161 = vld [vmem:[#allocation7 + $0x68] sm:$0xff]
    %v162 = vld [vmem:[#allocation7 + $0x70] sm:$0xff]
    %v163 = vld [vmem:[#allocation7 + $0x78] sm:$0xff]
    %v164 = vld [vmem:[%s3] sm:$0x1]
    %v166 = vperm.slane %v164, 0
    %168 = vmatpush.msra.mxu0 %v163
    %169 = vmatpush.msra.mxu0 %v162
    %170 = vmatpush.msra.mxu0 %v161
    %171 = vmatpush.msra.mxu0 %v160
    %172 = vmatpush.msra.mxu0 %v159
    %173 = vmatpush.msra.mxu0 %v158
    %174 = vmatpush.msra.mxu0 %v157
    %175 = vmatpush.msra.mxu0 %v156
    %176 = vmatpush.msra.mxu0 %v155
    %177 = vmatpush.msra.mxu0 %v154
    %178 = vmatpush.msra.mxu0 %v153
    %179 = vmatpush.msra.mxu0 %v152
    %180 = vmatpush.msra.mxu0 %v151
    %181 = vmatpush.msra.mxu0 %v150
    %182 = vmatpush.msra.mxu0 %v149
    %183 = vmatpush.msra.mxu0 %v148
    %184 = vmatmul.f32.gmra.mxu0 %v145
    %v185 = vpop.f32.mrf.mxu0
    %v186 = vadd.f32 %v166, %v185
    %187 = vdwg.mxu0
    %vm188 = vcmp.gt.f32.partialorder %v186, 0.0
    %v189 = vmul.f32 %v186, 0.1
    %v190 = vsel %vm188, %v186, %v189
    %v191 = vld [vmem:[#allocation8] sm:$0xff]
    %v192 = vld [vmem:[#allocation8 + $0x8] sm:$0xff]
    %v193 = vld [vmem:[#allocation8 + $0x10] sm:$0xff]
    %v194 = vld [vmem:[#allocation8 + $0x18] sm:$0xff]
    %v195 = vld [vmem:[#allocation8 + $0x20] sm:$0xff]
    %v196 = vld [vmem:[#allocation8 + $0x28] sm:$0xff]
    %v197 = vld [vmem:[#allocation8 + $0x30] sm:$0xff]
    %v198 = vld [vmem:[#allocation8 + $0x38] sm:$0xff]
    %v199 = vld [vmem:[#allocation8 + $0x40] sm:$0xff]
    %v200 = vld [vmem:[#allocation8 + $0x48] sm:$0xff]
    %v201 = vld [vmem:[#allocation8 + $0x50] sm:$0xff]
    %v202 = vld [vmem:[#allocation8 + $0x58] sm:$0xff]
    %v203 = vld [vmem:[#allocation8 + $0x60] sm:$0xff]
    %v204 = vld [vmem:[#allocation8 + $0x68] sm:$0xff]
    %v205 = vld [vmem:[#allocation8 + $0x70] sm:$0xff]
    %v206 = vld [vmem:[#allocation8 + $0x78] sm:$0xff]
    %207 = vmatpush.msra.mxu0 %v206
    %208 = vmatpush.msra.mxu0 %v205
    %209 = vmatpush.msra.mxu0 %v204
    %210 = vmatpush.msra.mxu0 %v203
    %211 = vmatpush.msra.mxu0 %v202
    %212 = vmatpush.msra.mxu0 %v201
    %213 = vmatpush.msra.mxu0 %v200
    %214 = vmatpush.msra.mxu0 %v199
    %215 = vmatpush.msra.mxu0 %v198
    %216 = vmatpush.msra.mxu0 %v197
    %217 = vmatpush.msra.mxu0 %v196
    %218 = vmatpush.msra.mxu0 %v195
    %219 = vmatpush.msra.mxu0 %v194
    %220 = vmatpush.msra.mxu0 %v193
    %221 = vmatpush.msra.mxu0 %v192
    %222 = vmatpush.msra.mxu0 %v191
    %223 = vmatmul.f32.gmra.mxu0 %v190
    %v224 = vpop.f32.mrf.mxu0
    %v225 = vadd.f32 0.0, %v224
    %226 = vdwg.mxu0
    %v227 = vpack.c.bf16 %v225, %v225
    %v228 = vld [vmem:[%s5] sm:$0x1]
    %v230 = vperm.slane %v228, 0
    %v233 = vsel %vm131, %v227, 0
    %235 = vmatpush.bf16.msra.mxu0 0
    %236 = vmatpush.bf16.msra.mxu0 0
    %237 = vmatpush.bf16.msra.mxu0 0
    %238 = vmatpush.bf16.msra.mxu0 0
    %239 = vmatpush.bf16.msra.mxu0 0
    %240 = vmatpush.bf16.msra.mxu0 0
    %241 = vmatpush.bf16.msra.mxu0 0
    %242 = vmatpush.bf16.msra.mxu0 %v233
    %243 = vmatmul.bf16.gmra.mxu0 %v129
    %v244 = vpop.f32.mrf.mxu0
    %v245 = vadd.f32 %v230, %v244
    %v246 = vpop.f32.mrf.mxu0
    %247 = vdwg.mxu0
    %vm248 = vcmp.gt.f32.partialorder %v245, 0.0
    %v249 = vmul.f32 %v245, 0.1
    %v250 = vsel %vm248, %v245, %v249
    %v251 = vld [vmem:[#allocation10] sm:$0xff]
    %v252 = vld [vmem:[#allocation10 + $0x8] sm:$0xff]
    %v253 = vld [vmem:[#allocation10 + $0x10] sm:$0xff]
    %v254 = vld [vmem:[#allocation10 + $0x18] sm:$0xff]
    %v255 = vld [vmem:[#allocation10 + $0x20] sm:$0xff]
    %v256 = vld [vmem:[#allocation10 + $0x28] sm:$0xff]
    %v257 = vld [vmem:[#allocation10 + $0x30] sm:$0xff]
    %v258 = vld [vmem:[#allocation10 + $0x38] sm:$0xff]
    %v259 = vld [vmem:[#allocation10 + $0x40] sm:$0xff]
    %v260 = vld [vmem:[#allocation10 + $0x48] sm:$0xff]
    %v261 = vld [vmem:[#allocation10 + $0x50] sm:$0xff]
    %v262 = vld [vmem:[#allocation10 + $0x58] sm:$0xff]
    %v263 = vld [vmem:[#allocation10 + $0x60] sm:$0xff]
    %v264 = vld [vmem:[#allocation10 + $0x68] sm:$0xff]
    %v265 = vld [vmem:[#allocation10 + $0x70] sm:$0xff]
    %v266 = vld [vmem:[#allocation10 + $0x78] sm:$0xff]
    %267 = vmatpush.msra.mxu0 %v266
    %268 = vmatpush.msra.mxu0 %v265
    %269 = vmatpush.msra.mxu0 %v264
    %270 = vmatpush.msra.mxu0 %v263
    %271 = vmatpush.msra.mxu0 %v262
    %272 = vmatpush.msra.mxu0 %v261
    %273 = vmatpush.msra.mxu0 %v260
    %274 = vmatpush.msra.mxu0 %v259
    %275 = vmatpush.msra.mxu0 %v258
    %276 = vmatpush.msra.mxu0 %v257
    %277 = vmatpush.msra.mxu0 %v256
    %278 = vmatpush.msra.mxu0 %v255
    %279 = vmatpush.msra.mxu0 %v254
    %280 = vmatpush.msra.mxu0 %v253
    %281 = vmatpush.msra.mxu0 %v252
    %282 = vmatpush.msra.mxu0 %v251
    %283 = vmatmul.f32.gmra.mxu0 %v250
    %v284 = vpop.f32.mrf.mxu0
    %v285 = vadd.f32 0.0, %v284
    %286 = vdwg.mxu0
    %v287 = vpack.c.bf16 %v285, %v285
    %v288 = vld [vmem:[%s7] sm:$0x1]
    %v290 = vperm.slane %v288, 0
    %v293 = vsel %vm131, %v287, 0
    %295 = vmatpush.bf16.msra.mxu0 0
    %296 = vmatpush.bf16.msra.mxu0 0
    %297 = vmatpush.bf16.msra.mxu0 0
    %298 = vmatpush.bf16.msra.mxu0 0
    %299 = vmatpush.bf16.msra.mxu0 0
    %300 = vmatpush.bf16.msra.mxu0 0
    %301 = vmatpush.bf16.msra.mxu0 0
    %302 = vmatpush.bf16.msra.mxu0 %v293
    %303 = vmatmul.bf16.gmra.mxu0 %v129
    %v304 = vpop.f32.mrf.mxu0
    %v305 = vadd.f32 %v290, %v304
    %v306 = vpop.f32.mrf.mxu0
    %307 = vdwg.mxu0
    %v308 = vld [vmem:[#allocation11] sm:$0xff]
    %v309 = vld [vmem:[#allocation11 + $0x8] sm:$0xff]
    %v310 = vld [vmem:[#allocation11 + $0x10] sm:$0xff]
    %v311 = vld [vmem:[#allocation11 + $0x18] sm:$0xff]
    %v312 = vld [vmem:[#allocation11 + $0x20] sm:$0xff]
    %v313 = vld [vmem:[#allocation11 + $0x28] sm:$0xff]
    %v314 = vld [vmem:[#allocation11 + $0x30] sm:$0xff]
    %v315 = vld [vmem:[#allocation11 + $0x38] sm:$0xff]
    %v316 = vld [vmem:[#allocation11 + $0x40] sm:$0xff]
    %v317 = vld [vmem:[#allocation11 + $0x48] sm:$0xff]
    %v318 = vld [vmem:[#allocation11 + $0x50] sm:$0xff]
    %v319 = vld [vmem:[#allocation11 + $0x58] sm:$0xff]
    %v320 = vld [vmem:[#allocation11 + $0x60] sm:$0xff]
    %v321 = vld [vmem:[#allocation11 + $0x68] sm:$0xff]
    %v322 = vld [vmem:[#allocation11 + $0x70] sm:$0xff]
    %v323 = vld [vmem:[#allocation11 + $0x78] sm:$0xff]
    %324 = vmatpush.msra.mxu0 %v323
    %325 = vmatpush.msra.mxu0 %v322
    %326 = vmatpush.msra.mxu0 %v321
    %327 = vmatpush.msra.mxu0 %v320
    %328 = vmatpush.msra.mxu0 %v319
    %329 = vmatpush.msra.mxu0 %v318
    %330 = vmatpush.msra.mxu0 %v317
    %331 = vmatpush.msra.mxu0 %v316
    %332 = vmatpush.msra.mxu0 %v315
    %333 = vmatpush.msra.mxu0 %v314
    %334 = vmatpush.msra.mxu0 %v313
    %335 = vmatpush.msra.mxu0 %v312
    %336 = vmatpush.msra.mxu0 %v311
    %337 = vmatpush.msra.mxu0 %v310
    %338 = vmatpush.msra.mxu0 %v309
    %339 = vmatpush.msra.mxu0 %v308
    %340 = vmatmul.f32.gmra.mxu0 %v305
    %v341 = vpop.f32.mrf.mxu0
    %v342 = vadd.f32 0.0, %v341
    %343 = vdwg.mxu0
    %v344 = vlaneseq
    %v345 = vand.u32 %v344, 127
    %vm346 = vcmp.lt.s32.totalorder %v345, 4
    %v347 = vsel %vm346, %v342, -1e+30
    %348 = vmax.xlane.f32.xlu0 %v347
    %v349 = vpop.xlane.xlu0 %348
    %v350 = vsub.f32 %v347, %v349
    %v351 = vmul.f32 %v350, 1.442695
    %v352 = vpow.pop %v351
    %353 = vadd.xlane.f32.xlu0 %v352
    %v354 = vpop.xlane.xlu0 %353
    %v355 = vrcp.pop %v354
    %v356 = vmul.f32 %v352, %v355
    %357 = vst [vmem:[#allocation13] sm:$0xff] %v356
    // Predicated region
    $region62: #{tpu_custom_call.1} parent=1 // pred_check
      _
    $region63: #{tpu_custom_call.1} parent=1 // pred_check_branch
      %359 = sbr.rel (0) target = $region65
    $region64: #{tpu_custom_call.1} parent=1 // pred_region
      %361 = vsyncadd [#allocation4], 0
      %s363 = sshll.u32 [#allocation13], 4
      %s364 = int_to_ptr.vmem [resolvable:$true] %s363
      %s365 = sshll.u32 %s9, 4
      %s366 = int_to_ptr.hbm [resolvable:$true] %s365
      %368 = dma.vmem_to_hbm [thread:$0]  %s364, 128, %s366, [#allocation4]
    $region65: #{tpu_custom_call.1} parent=1 // pred_fallthru
      _
    // Predicated region
    $region66: #{tpu_custom_call.1} parent=1 // pred_check
      _
    $region67: #{tpu_custom_call.1} parent=1 // pred_check_branch
      %370 = sbr.rel (0) target = $region69
    $region68: #{tpu_custom_call.1} parent=1 // pred_region
      %372 = dma.done [#allocation4], 128
    $region69: #{tpu_custom_call.1} parent=1 // pred_fallthru
      _
    %373 = vsyncpa [#allocation3], 1
    %374 = vsyncpa [#allocation6], 1
    %375 = vsyncpa [#allocation9], 1
    %376 = vsyncpa [#allocation12], 1
    %377 = vsyncpa [#allocation4], 1

</llo_original>
